<compile_context>
chip_gen: v6e
topology: v6e:2x2x1
jax: 0.10.0
libtpu: 0.0.40
codegen_flags: <defaults>
</compile_context>

<pallas_src>
from functools import partial

import jax
import jax.numpy as jnp
from jax import lax
from jax.experimental import pallas as pl
from jax.experimental.pallas import tpu as pltpu


# ----------------------------------------------------------------------------
# One-time parameter packing (do NOT call per step).
# ----------------------------------------------------------------------------
def pack_rnn4cell_params(params):
    """Pack raw PyTorch-layout params into the kernel's fused layout (run once)."""
    w_ih = jnp.asarray(params["w_ih"], jnp.float32)      # (3H, D_in), rows [r; z; n]
    w_hh = jnp.asarray(params["w_hh"], jnp.float32)      # (3H, H)
    b_ih = jnp.asarray(params["b_ih"], jnp.float32)      # (3H,)
    b_hh = jnp.asarray(params["b_hh"], jnp.float32)      # (3H,)
    w_t = jnp.asarray(params["w_tconv"], jnp.float32)    # (H, Cout, K)
    b_t = jnp.asarray(params["b_tconv"], jnp.float32)    # (Cout,)

    H = w_hh.shape[1]
    Cout, K = w_t.shape[1], w_t.shape[2]

    wi = w_ih.T                                           # (D_in, 3H), cols [r|z|n]
    wh = w_hh.T                                           # (H,    3H)
    b = jnp.stack([b_ih, b_hh], axis=0)                   # (2, 3H): row0=b_ih, row1=b_hh

    # Fold ConvTranspose1d (length-1 input) into one matmul; bias appended as last row.
    wt = jnp.transpose(w_t, (0, 2, 1)).reshape(H, K * Cout)      # Wt[c, k*Cout+o]
    bt = jnp.tile(b_t, K).reshape(1, K * Cout)                   # bt[k*Cout+o] = b_t[o]
    wtb = jnp.concatenate([wt, bt], axis=0)                      # (H+1, K*Cout)

    return {"wi": wi, "wh": wh, "b": b, "wtb": wtb}


# ----------------------------------------------------------------------------
# Single-step kernel: fused GRU gates + folded ConvTranspose1d, one output slab.
# ----------------------------------------------------------------------------
def _rnn4cell_kernel(xz_ref, h_ref, wi_ref, wh_ref, b_ref, wtb_ref, out_ref):
    H = h_ref.shape[1]
    xz = xz_ref[...]
    h = h_ref[...]

    # Fused gate pre-activations: two matmuls instead of six.
    gi = jnp.dot(xz, wi_ref[...], preferred_element_type=jnp.float32) + b_ref[0:1, :]
    gh = jnp.dot(h, wh_ref[...], preferred_element_type=jnp.float32) + b_ref[1:2, :]

    # PyTorch GRUCell semantics (gate order r, z, n).
    r = jax.nn.sigmoid(gi[:, :H] + gh[:, :H])
    z = jax.nn.sigmoid(gi[:, H:2 * H] + gh[:, H:2 * H])
    n = jnp.tanh(gi[:, 2 * H:] + r * gh[:, 2 * H:])
    h1 = (1.0 - z) * n + z * h

    # ConvTranspose1d on a length-1 input, folded into one matmul (+ bias row).
    y = jnp.dot(h1, wtb_ref[:H, :], preferred_element_type=jnp.float32) + wtb_ref[H:H + 1, :]

    # Single lane-dense output slab: [h1 | y] -> one VMEM block, one writeback.
    out_ref[:, :H] = h1
    out_ref[:, H:] = y


def rnn4cell_forward(x, global_cond, h, packed, *, K):
    """One RNN4Cell.forward step. `packed` = pack_rnn4cell_params(raw). Returns (y, h1)."""
    parts = [a for a in (x, global_cond) if a is not None]     # filter_none + cat(dim=1)
    xz = jnp.concatenate(parts, axis=1).astype(jnp.float32)
    h = h.astype(jnp.float32)

    B = xz.shape[0]
    H = h.shape[1]
    KCout = packed["wtb"].shape[1]
    Cout = KCout // K

    vmem = pl.BlockSpec(memory_space=pltpu.MemorySpace.VMEM)
    out = pl.pallas_call(
        _rnn4cell_kernel,
        out_shape=jax.ShapeDtypeStruct((B, H + KCout), jnp.float32),
        in_specs=[vmem] * 6,
        out_specs=vmem,
    )(xz, h, packed["wi"], packed["wh"], packed["b"], packed["wtb"])

    h1 = out[:, :H]
    y = out[:, H:].reshape(B, K, Cout)   # == tconv(h1.unsqueeze(2)).transpose(1, 2)
    return y, h1


# ----------------------------------------------------------------------------
# Sequence kernel: T steps in one launch, weights resident in VMEM, input
# projection batched over all timesteps as one large-M matmul.
# ----------------------------------------------------------------------------
def _rnn4cell_seq_kernel(xz_ref, h0_ref, wi_ref, wh_ref, b_ref, wtb_ref,
                         y_ref, hT_ref, gi_scr, h_scr):
    TB = xz_ref.shape[0]
    B, H = h0_ref.shape
    T = TB // B

    # Batched input projection for all T steps at once (does not depend on h).
    gi_scr[...] = (jnp.dot(xz_ref[...], wi_ref[...],
                           preferred_element_type=jnp.float32) + b_ref[0:1, :])

    h_scr[...] = h0_ref[...]
    wh = wh_ref[...]
    bh = b_ref[1:2, :]
    wt = wtb_ref[:H, :]
    bt = wtb_ref[H:H + 1, :]

    def step(t, carry):
        off = pl.multiple_of(t * B, B)
        h = h_scr[...]
        gi = gi_scr[pl.ds(off, B), :]
        gh = jnp.dot(h, wh, preferred_element_type=jnp.float32) + bh
        r = jax.nn.sigmoid(gi[:, :H] + gh[:, :H])
        z = jax.nn.sigmoid(gi[:, H:2 * H] + gh[:, H:2 * H])
        n = jnp.tanh(gi[:, 2 * H:] + r * gh[:, 2 * H:])
        h1 = (1.0 - z) * n + z * h
        h_scr[...] = h1
        y_ref[pl.ds(off, B), :] = (
            jnp.dot(h1, wt, preferred_element_type=jnp.float32) + bt)
        return carry

    lax.fori_loop(0, T, step, 0, unroll=True)
    hT_ref[...] = h_scr[...]


def rnn4cell_sequence(xz_seq, h0, packed, *, K):
    """Apply the cell over xz_seq (T, B, D_in) with weights kept resident in VMEM.

    Equivalent to looping rnn4cell_forward over t. Returns (y_seq (T,B,K,Cout), h_T).
    """
    T, B, D_in = xz_seq.shape
    H = h0.shape[1]
    KCout = packed["wtb"].shape[1]
    Cout = KCout // K

    xz_flat = xz_seq.reshape(T * B, D_in).astype(jnp.float32)
    h0 = h0.astype(jnp.float32)

    vmem = pl.BlockSpec(memory_space=pltpu.MemorySpace.VMEM)
    y_flat, hT = pl.pallas_call(
        _rnn4cell_seq_kernel,
        out_shape=(jax.ShapeDtypeStruct((T * B, KCout), jnp.float32),
                   jax.ShapeDtypeStruct((B, H), jnp.float32)),
        in_specs=[vmem] * 6,
        out_specs=(vmem, vmem),
        scratch_shapes=[pltpu.VMEM((T * B, 3 * H), jnp.float32),
                        pltpu.VMEM((B, H), jnp.float32)],
        input_output_aliases={1: 1},   # h0 buffer aliased to final hidden state
    )(xz_flat, h0, packed["wi"], packed["wh"], packed["b"], packed["wtb"])

    y_seq = y_flat.reshape(T, B, K, Cout)
    return y_seq, hT


# ----------------------------------------------------------------------------
# Pure-JAX reference of the PyTorch forward (for verification).
# ----------------------------------------------------------------------------
def _reference_cell(xz, h, params):
    H = h.shape[1]
    gi = xz @ params["w_ih"].T + params["b_ih"]
    gh = h @ params["w_hh"].T + params["b_hh"]
    r = jax.nn.sigmoid(gi[:, :H] + gh[:, :H])
    z = jax.nn.sigmoid(gi[:, H:2 * H] + gh[:, H:2 * H])
    n = jnp.tanh(gi[:, 2 * H:] + r * gh[:, 2 * H:])
    h1 = (1.0 - z) * n + z * h
    y = jnp.einsum("bc,cok->bko", h1, params["w_tconv"]) + params["b_tconv"][None, None, :]
    return y, h1


if __name__ == "__main__":
    # Small synthetic shapes consistent with the module.
    B = 8            # batch
    D_X = 12         # x feature dim
    D_C = 4          # global_cond feature dim
    D_IN = D_X + D_C # gru.input_size
    H = 32           # gru.hidden_size
    COUT = 4         # tconv out_channels
    K = 8            # tconv kernel_size (=> output frames per step)
    T = 8            # sequence length for the resident-weight sequence kernel

    key = jax.random.PRNGKey(0)
    ks = jax.random.split(key, 10)
    scale = 0.1
    params = {
        "w_ih": scale * jax.random.normal(ks[0], (3 * H, D_IN), jnp.float32),
        "w_hh": scale * jax.random.normal(ks[1], (3 * H, H), jnp.float32),
        "b_ih": scale * jax.random.normal(ks[2], (3 * H,), jnp.float32),
        "b_hh": scale * jax.random.normal(ks[3], (3 * H,), jnp.float32),
        "w_tconv": scale * jax.random.normal(ks[4], (H, COUT, K), jnp.float32),
        "b_tconv": scale * jax.random.normal(ks[5], (COUT,), jnp.float32),
    }
    packed = pack_rnn4cell_params(params)   # one-time packing, not per step

    x = jax.random.normal(ks[6], (B, D_X), jnp.float32)
    global_cond = jax.random.normal(ks[7], (B, D_C), jnp.float32)
    h = jax.random.normal(ks[8], (B, H), jnp.float32)

    # --- single-step cell (matches RNN4Cell.forward) ---
    fwd = jax.jit(partial(rnn4cell_forward, K=K))
    y, h1 = fwd(x, global_cond, h, packed)
    jax.block_until_ready((y, h1))

    xz0 = jnp.concatenate([x, global_cond], axis=1)
    y_ref, h1_ref = _reference_cell(xz0, h, params)
    assert y.shape == (B, K, COUT) and h1.shape == (B, H)
    assert jnp.allclose(y, y_ref, atol=1e-5, rtol=1e-5)
    assert jnp.allclose(h1, h1_ref, atol=1e-5, rtol=1e-5)

    # --- sequence mode: T steps in one launch, weights resident in VMEM ---
    xz_seq = jax.random.normal(ks[9], (T, B, D_IN), jnp.float32)
    seq_fwd = jax.jit(partial(rnn4cell_sequence, K=K))
    y_seq, hT = seq_fwd(xz_seq, h, packed)
    jax.block_until_ready((y_seq, hT))

    h_r = h
    ys = []
    for t in range(T):
        y_t, h_r = _reference_cell(xz_seq[t], h_r, params)
        ys.append(y_t)
    y_seq_ref = jnp.stack(ys, axis=0)
    assert y_seq.shape == (T, B, K, COUT) and hT.shape == (B, H)
    assert jnp.allclose(y_seq, y_seq_ref, atol=1e-4, rtol=1e-4)
    assert jnp.allclose(hT, h_r, atol=1e-4, rtol=1e-4)

    print("KERNEL_OK")
</pallas_src>

<mosaic_0001>
module attributes {stable_mosaic.version = 11 : i64} {
  func.func @_rnn4cell_kernel(%arg0: memref<8x16xf32, #tpu.memory_space<vmem>>, %arg1: memref<8x32xf32, #tpu.memory_space<vmem>>, %arg2: memref<16x96xf32, #tpu.memory_space<vmem>>, %arg3: memref<32x96xf32, #tpu.memory_space<vmem>>, %arg4: memref<2x96xf32, #tpu.memory_space<vmem>>, %arg5: memref<33x32xf32, #tpu.memory_space<vmem>>, %arg6: memref<8x64xf32, #tpu.memory_space<vmem>>) attributes {dimension_semantics = [], scalar_prefetch = 0 : i64, scratch_operands = 0 : i64, tpu.core_type = #tpu.core_type<tc>} {
    %c0 = arith.constant 0 : index
    %c0_0 = arith.constant 0 : index
    %0 = vector.load %arg0[%c0, %c0_0] : memref<8x16xf32, #tpu.memory_space<vmem>>, vector<8x16xf32>
    %c0_1 = arith.constant 0 : index
    %c0_2 = arith.constant 0 : index
    %1 = vector.load %arg1[%c0_1, %c0_2] : memref<8x32xf32, #tpu.memory_space<vmem>>, vector<8x32xf32>
    %c0_3 = arith.constant 0 : index
    %c0_4 = arith.constant 0 : index
    %2 = vector.load %arg2[%c0_3, %c0_4] : memref<16x96xf32, #tpu.memory_space<vmem>>, vector<16x96xf32>
    %cst = arith.constant dense<0.000000e+00> : vector<8x96xf32>
    %3 = tpu.matmul %0, %2, %cst {dimension_numbers = #tpu.dot_dimension_numbers<[1], [0], [0], [1], [0, 0, 1, 1], [], []>} : vector<8x16xf32>, vector<16x96xf32>, vector<8x96xf32> -> vector<8x96xf32>
    %c0_5 = arith.constant 0 : index
    %c0_6 = arith.constant 0 : index
    %4 = vector.load %arg4[%c0_5, %c0_6] : memref<2x96xf32, #tpu.memory_space<vmem>>, vector<1x96xf32>
    %5 = vector.broadcast %4 : vector<1x96xf32> to vector<8x96xf32>
    %6 = arith.addf %3, %5 : vector<8x96xf32>
    %c0_7 = arith.constant 0 : index
    %c0_8 = arith.constant 0 : index
    %7 = vector.load %arg3[%c0_7, %c0_8] : memref<32x96xf32, #tpu.memory_space<vmem>>, vector<32x96xf32>
    %cst_9 = arith.constant dense<0.000000e+00> : vector<8x96xf32>
    %8 = tpu.matmul %1, %7, %cst_9 {dimension_numbers = #tpu.dot_dimension_numbers<[1], [0], [0], [1], [0, 0, 1, 1], [], []>} : vector<8x32xf32>, vector<32x96xf32>, vector<8x96xf32> -> vector<8x96xf32>
    %c1 = arith.constant 1 : index
    %c0_10 = arith.constant 0 : index
    %9 = vector.load %arg4[%c1, %c0_10] : memref<2x96xf32, #tpu.memory_space<vmem>>, vector<1x96xf32>
    %10 = vector.broadcast %9 : vector<1x96xf32> to vector<8x96xf32>
    %11 = arith.addf %8, %10 : vector<8x96xf32>
    %12 = vector.extract_strided_slice %6 {offsets = [0, 0], sizes = [8, 32], strides = [1, 1]} : vector<8x96xf32> to vector<8x32xf32>
    %13 = vector.extract_strided_slice %11 {offsets = [0, 0], sizes = [8, 32], strides = [1, 1]} : vector<8x96xf32> to vector<8x32xf32>
    %14 = arith.addf %12, %13 : vector<8x32xf32>
    %15 = arith.negf %14 : vector<8x32xf32>
    %16 = math.exp %15 : vector<8x32xf32>
    %cst_11 = arith.constant 1.000000e+00 : f32
    %17 = vector.broadcast %cst_11 : f32 to vector<8x32xf32>
    %18 = arith.addf %17, %16 : vector<8x32xf32>
    %19 = arith.divf %17, %18 : vector<8x32xf32>
    %20 = vector.extract_strided_slice %6 {offsets = [0, 32], sizes = [8, 32], strides = [1, 1]} : vector<8x96xf32> to vector<8x32xf32>
    %21 = vector.extract_strided_slice %11 {offsets = [0, 32], sizes = [8, 32], strides = [1, 1]} : vector<8x96xf32> to vector<8x32xf32>
    %22 = arith.addf %20, %21 : vector<8x32xf32>
    %23 = arith.negf %22 : vector<8x32xf32>
    %24 = math.exp %23 : vector<8x32xf32>
    %cst_12 = arith.constant 1.000000e+00 : f32
    %25 = vector.broadcast %cst_12 : f32 to vector<8x32xf32>
    %26 = arith.addf %25, %24 : vector<8x32xf32>
    %27 = arith.divf %25, %26 : vector<8x32xf32>
    %28 = vector.extract_strided_slice %6 {offsets = [0, 64], sizes = [8, 32], strides = [1, 1]} : vector<8x96xf32> to vector<8x32xf32>
    %29 = vector.extract_strided_slice %11 {offsets = [0, 64], sizes = [8, 32], strides = [1, 1]} : vector<8x96xf32> to vector<8x32xf32>
    %30 = arith.mulf %19, %29 : vector<8x32xf32>
    %31 = arith.addf %28, %30 : vector<8x32xf32>
    %32 = math.tanh %31 : vector<8x32xf32>
    %cst_13 = arith.constant 1.000000e+00 : f32
    %33 = vector.broadcast %cst_13 : f32 to vector<8x32xf32>
    %34 = arith.subf %33, %27 : vector<8x32xf32>
    %35 = arith.mulf %34, %32 : vector<8x32xf32>
    %36 = arith.mulf %27, %1 : vector<8x32xf32>
    %37 = arith.addf %35, %36 : vector<8x32xf32>
    %c0_14 = arith.constant 0 : index
    %c0_15 = arith.constant 0 : index
    %38 = vector.load %arg5[%c0_14, %c0_15] : memref<33x32xf32, #tpu.memory_space<vmem>>, vector<32x32xf32>
    %cst_16 = arith.constant dense<0.000000e+00> : vector<8x32xf32>
    %39 = tpu.matmul %37, %38, %cst_16 {dimension_numbers = #tpu.dot_dimension_numbers<[1], [0], [0], [1], [0, 0, 1, 1], [], []>} : vector<8x32xf32>, vector<32x32xf32>, vector<8x32xf32> -> vector<8x32xf32>
    %c32 = arith.constant 32 : index
    %c0_17 = arith.constant 0 : index
    %40 = vector.load %arg5[%c32, %c0_17] : memref<33x32xf32, #tpu.memory_space<vmem>>, vector<1x32xf32>
    %41 = vector.broadcast %40 : vector<1x32xf32> to vector<8x32xf32>
    %42 = arith.addf %39, %41 : vector<8x32xf32>
    %c0_18 = arith.constant 0 : index
    %c0_19 = arith.constant 0 : index
    %43 = vector.load %arg6[%c0_18, %c0_19] : memref<8x64xf32, #tpu.memory_space<vmem>>, vector<8x32xf32>
    tpu.vector_store %arg6[%c0_18, %c0_19], %37 {strides = array<i32>} : memref<8x64xf32, #tpu.memory_space<vmem>>, vector<8x32xf32>,
    %c0_20 = arith.constant 0 : index
    %c32_21 = arith.constant 32 : index
    %44 = vector.load %arg6[%c0_20, %c32_21] : memref<8x64xf32, #tpu.memory_space<vmem>>, vector<8x32xf32>
    tpu.vector_store %arg6[%c0_20, %c32_21], %42 {strides = array<i32>} : memref<8x64xf32, #tpu.memory_space<vmem>>, vector<8x32xf32>,
    return
  }
}

</mosaic_0001>

<llo_original>
// kernel: rnn4cell_forward.1
$region0: #{rnn4cell_forward.1}
  #allocation0 [shape = 'u32[]', space=smem, size = 0x4, offset = 0x4, fixed_abs, tag = 'smem constant byte address 0x4 - core index']
  #allocation1 [shape = 'u32[144,128]{1,0:T(1,128)}', space=vmem, size = 0x12000, scoped, tag = 'internal scratch']
  %s0 = inlined_call_operand.vmem [shape: f32[8,16], index: 0, kind: input, shape index: {}]
  %s1 = inlined_call_operand.vmem [shape: f32[8,32], index: 1, kind: input, shape index: {}]
  %s2 = inlined_call_operand.vmem [shape: f32[16,96], index: 2, kind: input, shape index: {}]
  %s3 = inlined_call_operand.vmem [shape: f32[32,96], index: 3, kind: input, shape index: {}]
  %s4 = inlined_call_operand.vmem [shape: f32[2,96], index: 4, kind: input, shape index: {}]
  %s5 = inlined_call_operand.vmem [shape: f32[33,32], index: 5, kind: input, shape index: {}]
  %s6 = inlined_call_operand.vmem [shape: f32[8,64], index: 6, kind: output, shape index: {}]
  %s7 = sld [smem:[#allocation0]]
  $region34: #{rnn4cell_forward.1} parent=0
    _
  %s9 = ssub.s32 1, %s7
  %s10 = scalar_select 0, %s9, %s7
  // Predicated region
  $region2: #{rnn4cell_forward.1} parent=0 // pred_check
    _
  $region3: #{rnn4cell_forward.1} parent=0 // pred_check_branch
    %12 = sbr.rel (0) target = $region5
  $region4: #{rnn4cell_forward.1} parent=0 // pred_region
    _
  $region5: #{rnn4cell_forward.1} parent=0 // pred_fallthru
    _
  // Predicated region
  $region6: #{rnn4cell_forward.1} parent=0 // pred_check
    _
  $region7: #{rnn4cell_forward.1} parent=0 // pred_check_branch
    %14 = sbr.rel (0) target = $region9
  $region8: #{rnn4cell_forward.1} parent=0 // pred_region
    _
  $region9: #{rnn4cell_forward.1} parent=0 // pred_fallthru
    _
  // Predicated region
  $region10: #{rnn4cell_forward.1} parent=0 // pred_check
    _
  $region11: #{rnn4cell_forward.1} parent=0 // pred_check_branch
    %16 = sbr.rel (0) target = $region13
  $region12: #{rnn4cell_forward.1} parent=0 // pred_region
    _
  $region13: #{rnn4cell_forward.1} parent=0 // pred_fallthru
    _
  // Predicated region
  $region14: #{rnn4cell_forward.1} parent=0 // pred_check
    _
  $region15: #{rnn4cell_forward.1} parent=0 // pred_check_branch
    %18 = sbr.rel (0) target = $region17
  $region16: #{rnn4cell_forward.1} parent=0 // pred_region
    _
  $region17: #{rnn4cell_forward.1} parent=0 // pred_fallthru
    _
  // Predicated region
  $region18: #{rnn4cell_forward.1} parent=0 // pred_check
    _
  $region19: #{rnn4cell_forward.1} parent=0 // pred_check_branch
    %20 = sbr.rel (0) target = $region21
  $region20: #{rnn4cell_forward.1} parent=0 // pred_region
    _
  $region21: #{rnn4cell_forward.1} parent=0 // pred_fallthru
    _
  // Predicated region
  $region22: #{rnn4cell_forward.1} parent=0 // pred_check
    _
  $region23: #{rnn4cell_forward.1} parent=0 // pred_check_branch
    %22 = sbr.rel (0) target = $region25
  $region24: #{rnn4cell_forward.1} parent=0 // pred_region
    _
  $region25: #{rnn4cell_forward.1} parent=0 // pred_fallthru
    _
  %v23 = vld [vmem:[%s0] sm:$0xff]
  %v24 = vld [vmem:[%s1] sm:$0xff]
  %v25 = vld [vmem:[%s2] sm:$0xff]
  %v26 = vld [vmem:[%s2 + $0x8] sm:$0xff]
  %v27 = vld [vmem:[%s4] sm:$0x1]
  %v28 = vlaneseq
  %v29 = vshrl.u32 %v28, 7
  %v30 = vsub.s32 0, %v29
  %v31 = vrot.slane %v27, %v30
  %vm32 = vcmask 130048
  %v34 = vsel %vm32, %v23, 0
  %36 = vmatprep.subr.mxu0 0.0
  %37 = vmatpush1.msra.mxu0 0.0
  %38 = vmatprep.subr.mxu0 0.0
  %39 = vmatpush1.msra.mxu0 0.0
  %40 = vmatprep.subr.mxu0 0.0
  %41 = vmatpush1.msra.mxu0 0.0
  %42 = vmatprep.subr.mxu0 0.0
  %43 = vmatpush1.msra.mxu0 0.0
  %44 = vmatprep.subr.mxu0 0.0
  %45 = vmatpush1.msra.mxu0 0.0
  %46 = vmatprep.subr.mxu0 0.0
  %47 = vmatpush1.msra.mxu0 0.0
  %48 = vmatprep.subr.mxu0 0.0
  %49 = vmatpush1.msra.mxu0 0.0
  %50 = vmatprep.subr.mxu0 0.0
  %51 = vmatpush1.msra.mxu0 0.0
  %52 = vmatprep.subr.mxu0 0.0
  %53 = vmatpush1.msra.mxu0 0.0
  %54 = vmatprep.subr.mxu0 0.0
  %55 = vmatpush1.msra.mxu0 0.0
  %56 = vmatprep.subr.mxu0 0.0
  %57 = vmatpush1.msra.mxu0 0.0
  %58 = vmatprep.subr.mxu0 0.0
  %59 = vmatpush1.msra.mxu0 0.0
  %60 = vmatprep.subr.mxu0 0.0
  %61 = vmatpush1.msra.mxu0 0.0
  %62 = vmatprep.subr.mxu0 0.0
  %63 = vmatpush1.msra.mxu0 0.0
  %64 = vmatprep.subr.mxu0 0.0
  %65 = vmatpush1.msra.mxu0 %v26
  %66 = vmatprep.subr.mxu0 0.0
  %67 = vmatpush1.msra.mxu0 %v25
  %68 = vmatprep.subr.mxu0 0.0
  %69 = vmatpush2.msra.mxu0 0.0
  %70 = vmatprep.subr.mxu0 0.0
  %71 = vmatpush2.msra.mxu0 0.0
  %72 = vmatprep.subr.mxu0 0.0
  %73 = vmatpush2.msra.mxu0 0.0
  %74 = vmatprep.subr.mxu0 0.0
  %75 = vmatpush2.msra.mxu0 0.0
  %76 = vmatprep.subr.mxu0 0.0
  %77 = vmatpush2.msra.mxu0 0.0
  %78 = vmatprep.subr.mxu0 0.0
  %79 = vmatpush2.msra.mxu0 0.0
  %80 = vmatprep.subr.mxu0 0.0
  %81 = vmatpush2.msra.mxu0 0.0
  %82 = vmatprep.subr.mxu0 0.0
  %83 = vmatpush2.msra.mxu0 0.0
  %84 = vmatprep.subr.mxu0 0.0
  %85 = vmatpush2.msra.mxu0 0.0
  %86 = vmatprep.subr.mxu0 0.0
  %87 = vmatpush2.msra.mxu0 0.0
  %88 = vmatprep.subr.mxu0 0.0
  %89 = vmatpush2.msra.mxu0 0.0
  %90 = vmatprep.subr.mxu0 0.0
  %91 = vmatpush2.msra.mxu0 0.0
  %92 = vmatprep.subr.mxu0 0.0
  %93 = vmatpush2.msra.mxu0 0.0
  %94 = vmatprep.subr.mxu0 0.0
  %95 = vmatpush2.msra.mxu0 0.0
  %96 = vmatprep.subr.mxu0 0.0
  %97 = vmatpush2.msra.mxu0 0.0
  %98 = vmatprep.subr.mxu0 0.0
  %99 = vmatpush2.msra.mxu0 0.0
  %100 = vmatprep.mubr.f32.mxu0 0.0
  %101 = vmatmul.mubr.f32.gmra.mxu0 %v34
  %v102 = vpop.f32.mrf.mxu0
  %v103 = vadd.f32 %v31, %v102
  %v104 = vpop.f32.mrf.mxu0
  %105 = vdwg.mxu0
  %v106 = vld [vmem:[%s3] sm:$0xff]
  %v107 = vld [vmem:[%s3 + $0x8] sm:$0xff]
  %v108 = vld [vmem:[%s3 + $0x10] sm:$0xff]
  %v109 = vld [vmem:[%s3 + $0x18] sm:$0xff]
  %v110 = vld [vmem:[%s4 + $0x1] sm:$0x1]
  %v111 = vlaneseq
  %v112 = vshrl.u32 %v111, 7
  %v113 = vsub.s32 0, %v112
  %v114 = vrot.slane %v110, %v113
  %vm115 = vcmask 261120
  %v117 = vsel %vm115, %v24, 0
  %119 = vmatprep.subr.mxu0 0.0
  %120 = vmatpush1.msra.mxu0 0.0
  %121 = vmatprep.subr.mxu0 0.0
  %122 = vmatpush1.msra.mxu0 0.0
  %123 = vmatprep.subr.mxu0 0.0
  %124 = vmatpush1.msra.mxu0 0.0
  %125 = vmatprep.subr.mxu0 0.0
  %126 = vmatpush1.msra.mxu0 0.0
  %127 = vmatprep.subr.mxu0 0.0
  %128 = vmatpush1.msra.mxu0 0.0
  %129 = vmatprep.subr.mxu0 0.0
  %130 = vmatpush1.msra.mxu0 0.0
  %131 = vmatprep.subr.mxu0 0.0
  %132 = vmatpush1.msra.mxu0 0.0
  %133 = vmatprep.subr.mxu0 0.0
  %134 = vmatpush1.msra.mxu0 0.0
  %135 = vmatprep.subr.mxu0 0.0
  %136 = vmatpush1.msra.mxu0 0.0
  %137 = vmatprep.subr.mxu0 0.0
  %138 = vmatpush1.msra.mxu0 0.0
  %139 = vmatprep.subr.mxu0 0.0
  %140 = vmatpush1.msra.mxu0 0.0
  %141 = vmatprep.subr.mxu0 0.0
  %142 = vmatpush1.msra.mxu0 0.0
  %143 = vmatprep.subr.mxu0 0.0
  %144 = vmatpush1.msra.mxu0 %v109
  %145 = vmatprep.subr.mxu0 0.0
  %146 = vmatpush1.msra.mxu0 %v108
  %147 = vmatprep.subr.mxu0 0.0
  %148 = vmatpush1.msra.mxu0 %v107
  %149 = vmatprep.subr.mxu0 0.0
  %150 = vmatpush1.msra.mxu0 %v106
  %151 = vmatprep.subr.mxu0 0.0
  %152 = vmatpush2.msra.mxu0 0.0
  %153 = vmatprep.subr.mxu0 0.0
  %154 = vmatpush2.msra.mxu0 0.0
  %155 = vmatprep.subr.mxu0 0.0
  %156 = vmatpush2.msra.mxu0 0.0
  %157 = vmatprep.subr.mxu0 0.0
  %158 = vmatpush2.msra.mxu0 0.0
  %159 = vmatprep.subr.mxu0 0.0
  %160 = vmatpush2.msra.mxu0 0.0
  %161 = vmatprep.subr.mxu0 0.0
  %162 = vmatpush2.msra.mxu0 0.0
  %163 = vmatprep.subr.mxu0 0.0
  %164 = vmatpush2.msra.mxu0 0.0
  %165 = vmatprep.subr.mxu0 0.0
  %166 = vmatpush2.msra.mxu0 0.0
  %167 = vmatprep.subr.mxu0 0.0
  %168 = vmatpush2.msra.mxu0 0.0
  %169 = vmatprep.subr.mxu0 0.0
  %170 = vmatpush2.msra.mxu0 0.0
  %171 = vmatprep.subr.mxu0 0.0
  %172 = vmatpush2.msra.mxu0 0.0
  %173 = vmatprep.subr.mxu0 0.0
  %174 = vmatpush2.msra.mxu0 0.0
  %175 = vmatprep.subr.mxu0 0.0
  %176 = vmatpush2.msra.mxu0 0.0
  %177 = vmatprep.subr.mxu0 0.0
  %178 = vmatpush2.msra.mxu0 0.0
  %179 = vmatprep.subr.mxu0 0.0
  %180 = vmatpush2.msra.mxu0 0.0
  %181 = vmatprep.subr.mxu0 0.0
  %182 = vmatpush2.msra.mxu0 0.0
  %183 = vmatprep.mubr.f32.mxu0 0.0
  %184 = vmatmul.mubr.f32.gmra.mxu0 %v117
  %v185 = vpop.f32.mrf.mxu0
  %v186 = vadd.f32 %v114, %v185
  %v187 = vpop.f32.mrf.mxu0
  %188 = vdwg.mxu0
  %v189 = vadd.f32 %v103, %v186
  %v190 = vxor.u32 %v189, 2147483648
  %v191 = vmul.f32 %v190, 1.442695
  %v192 = vpow.pop %v191
  %v193 = vadd.f32 %v192, 1.0
  %v194 = vrcp.pop %v193
  %v195 = vmul.f32 1.0, %v194
  %197 = vrot.lane.b32.xlu0 %v186, 64
  %v198 = vpop.permute.xlu0 %197
  %v200 = vmul.f32 %v195, %v198
  %202 = vrot.lane.b32.xlu0 %v200, 64
  %v203 = vpop.permute.xlu0 %202
  %v205 = vadd.f32 %v103, %v203
  %v206 = vtanh.pop %v205
  %v207 = vsub.f32 1.0, %v195
  %209 = vrot.lane.b32.xlu0 %v206, 96
  %v210 = vpop.permute.xlu0 %209
  %v212 = vmul.f32 %v207, %v210
  %213 = vrot.lane.b32.xlu0 %v24, 32
  %v214 = vpop.permute.xlu0 %213
  %v216 = vmul.f32 %v195, %v214
  %v217 = vadd.f32 %v212, %v216
  %v218 = vld [vmem:[%s5] sm:$0xff]
  %v219 = vld [vmem:[%s5 + $0x8] sm:$0xff]
  %v220 = vld [vmem:[%s5 + $0x10] sm:$0xff]
  %v221 = vld [vmem:[%s5 + $0x18] sm:$0xff]
  %v222 = vld [vmem:[%s5 + $0x20] sm:$0x1]
  %v223 = vlaneseq
  %v224 = vshrl.u32 %v223, 7
  %v225 = vsub.s32 0, %v224
  %v226 = vrot.slane %v222, %v225
  %228 = vrot.lane.b32.xlu0 %v217, 96
  %v229 = vpop.permute.xlu0 %228
  %v230 = vsel %vm115, %v229, 0
  %232 = vmatprep.subr.mxu0 0.0
  %233 = vmatpush1.msra.mxu0 0.0
  %234 = vmatprep.subr.mxu0 0.0
  %235 = vmatpush1.msra.mxu0 0.0
  %236 = vmatprep.subr.mxu0 0.0
  %237 = vmatpush1.msra.mxu0 0.0
  %238 = vmatprep.subr.mxu0 0.0
  %239 = vmatpush1.msra.mxu0 0.0
  %240 = vmatprep.subr.mxu0 0.0
  %241 = vmatpush1.msra.mxu0 0.0
  %242 = vmatprep.subr.mxu0 0.0
  %243 = vmatpush1.msra.mxu0 0.0
  %244 = vmatprep.subr.mxu0 0.0
  %245 = vmatpush1.msra.mxu0 0.0
  %246 = vmatprep.subr.mxu0 0.0
  %247 = vmatpush1.msra.mxu0 0.0
  %248 = vmatprep.subr.mxu0 0.0
  %249 = vmatpush1.msra.mxu0 0.0
  %250 = vmatprep.subr.mxu0 0.0
  %251 = vmatpush1.msra.mxu0 0.0
  %252 = vmatprep.subr.mxu0 0.0
  %253 = vmatpush1.msra.mxu0 0.0
  %254 = vmatprep.subr.mxu0 0.0
  %255 = vmatpush1.msra.mxu0 0.0
  %256 = vmatprep.subr.mxu0 0.0
  %257 = vmatpush1.msra.mxu0 %v221
  %258 = vmatprep.subr.mxu0 0.0
  %259 = vmatpush1.msra.mxu0 %v220
  %260 = vmatprep.subr.mxu0 0.0
  %261 = vmatpush1.msra.mxu0 %v219
  %262 = vmatprep.subr.mxu0 0.0
  %263 = vmatpush1.msra.mxu0 %v218
  %264 = vmatprep.subr.mxu0 0.0
  %265 = vmatpush2.msra.mxu0 0.0
  %266 = vmatprep.subr.mxu0 0.0
  %267 = vmatpush2.msra.mxu0 0.0
  %268 = vmatprep.subr.mxu0 0.0
  %269 = vmatpush2.msra.mxu0 0.0
  %270 = vmatprep.subr.mxu0 0.0
  %271 = vmatpush2.msra.mxu0 0.0
  %272 = vmatprep.subr.mxu0 0.0
  %273 = vmatpush2.msra.mxu0 0.0
  %274 = vmatprep.subr.mxu0 0.0
  %275 = vmatpush2.msra.mxu0 0.0
  %276 = vmatprep.subr.mxu0 0.0
  %277 = vmatpush2.msra.mxu0 0.0
  %278 = vmatprep.subr.mxu0 0.0
  %279 = vmatpush2.msra.mxu0 0.0
  %280 = vmatprep.subr.mxu0 0.0
  %281 = vmatpush2.msra.mxu0 0.0
  %282 = vmatprep.subr.mxu0 0.0
  %283 = vmatpush2.msra.mxu0 0.0
  %284 = vmatprep.subr.mxu0 0.0
  %285 = vmatpush2.msra.mxu0 0.0
  %286 = vmatprep.subr.mxu0 0.0
  %287 = vmatpush2.msra.mxu0 0.0
  %288 = vmatprep.subr.mxu0 0.0
  %289 = vmatpush2.msra.mxu0 0.0
  %290 = vmatprep.subr.mxu0 0.0
  %291 = vmatpush2.msra.mxu0 0.0
  %292 = vmatprep.subr.mxu0 0.0
  %293 = vmatpush2.msra.mxu0 0.0
  %294 = vmatprep.subr.mxu0 0.0
  %295 = vmatpush2.msra.mxu0 0.0
  %296 = vmatprep.mubr.f32.mxu0 0.0
  %297 = vmatmul.mubr.f32.gmra.mxu0 %v230
  %v298 = vpop.f32.mrf.mxu0
  %v299 = vadd.f32 %v226, %v298
  %v300 = vpop.f32.mrf.mxu0
  %301 = vdwg.mxu0
  %303 = vst.msk [vmem:[%s6] sm:$0xff] %vm115, %v229
  %305 = vrot.lane.b32.xlu0 %v299, 32
  %v306 = vpop.permute.xlu0 %305
  %vm308 = vcmask 523520
  %309 = vst.msk [vmem:[%s6] sm:$0xff] %vm308, %v306
  // Predicated region
  $region26: #{rnn4cell_forward.1} parent=0 // pred_check
    _
  $region27: #{rnn4cell_forward.1} parent=0 // pred_check_branch
    %311 = sbr.rel (0) target = $region29
  $region28: #{rnn4cell_forward.1} parent=0 // pred_region
    _
  $region29: #{rnn4cell_forward.1} parent=0 // pred_fallthru
    _
  // Predicated region
  $region30: #{rnn4cell_forward.1} parent=0 // pred_check
    _
  $region31: #{rnn4cell_forward.1} parent=0 // pred_check_branch
    %313 = sbr.rel (0) target = $region33
  $region32: #{rnn4cell_forward.1} parent=0 // pred_region
    _
  $region33: #{rnn4cell_forward.1} parent=0 // pred_fallthru
    _

</llo_original>
